<compile_context>
chip_gen: v5e
topology: v5e:2x2
jax: 0.10.0
libtpu: 0.0.40
codegen_flags: <defaults>
</compile_context>

<pallas_src>
import functools

import jax
import jax.numpy as jnp
from jax.experimental import pallas as pl
from jax.experimental.pallas import tpu as pltpu


def _round_up(x, m):
    return (x + m - 1) // m * m


def _const_block_spec(shape, index_map):
    """BlockSpec for an operand that is constant across the whole grid.

    Single-buffer it when the running JAX supports `pipeline_mode`; constant
    operands do not need double buffering (halves their VMEM residency, which
    matters on v7x's 64 MiB VMEM / v5e's 16 MiB default scoped limit).
    """
    if hasattr(pl, "Buffered"):
        try:
            return pl.BlockSpec(shape, index_map, pipeline_mode=pl.Buffered(1))
        except TypeError:
            pass
    return pl.BlockSpec(shape, index_map)


def attention_kernel(x_ref, wqkv_ref, wo_ref, bo_ref, o_ref, catT_ref, *,
                     n, heads, d, d_pad):
    """Grid = (batch, heads); one (batch element, head) pair per step.

    x_ref:    (1, n, dim)         activations (block revisited across heads ->
                                  DMA'd once per batch element by the pipeline)
    wqkv_ref: (1, dim, 3*d)       this head's fused [Wq|Wk|Wv]^T slice
                                  (softmax scale pre-folded into the Wq columns)
    wo_ref:   (heads*d_pad, dim)  padded Wo^T (constant, single-buffered)
    bo_ref:   (1, dim)            output bias (constant, single-buffered)
    o_ref:    (1, n, dim)         output block (written once, at the last head)
    catT_ref: (heads*d_pad, n)    f32 scratch: transposed concat of per-head
                                  attention outputs; features live on sublanes
                                  so the per-head offset is a tile-aligned
                                  dynamic sublane offset.
    """
    hi = pl.program_id(1)
    x = x_ref[0]                                               # (n, dim)

    # Zero the scratch's pad rows once per batch element (only needed when
    # head_dim is padded up to the 8-sublane tile; pad rows hit zero Wo rows too).
    if d_pad != d:
        @pl.when(hi == 0)
        def _():
            catT_ref[...] = jnp.zeros_like(catT_ref)

    # --- Per-head fused QKV projection: ONE (n, dim) @ (dim, 3*d) MXU GEMM.
    #     K = dim (full contraction depth); only this head's weight slice is
    #     resident / pipelined over the heads grid axis.
    qkv = jnp.dot(x, wqkv_ref[0], preferred_element_type=jnp.float32)   # (n, 3d)
    q = qkv[:, :d]              # softmax scale already folded into the Wq columns
    k = qkv[:, d:2 * d]
    v = qkv[:, 2 * d:]

    # --- Scores: q @ k^T (contract the last dims; no transpose materialized).
    s = jax.lax.dot_general(q, k, (((1,), (1,)), ((), ())),
                            preferred_element_type=jnp.float32)         # (n, n)

    # --- Row softmax in f32: max-subtract, exp (EUP), reciprocal + multiply.
    # TODO(synk): flash-style KV tiling (online softmax) for long sequences.
    s = s - jnp.max(s, axis=-1, keepdims=True)
    e = jnp.exp(s)
    inv = pl.reciprocal(jnp.sum(e, axis=-1, keepdims=True), approx=False)
    p = e * inv                                                          # (n, n)

    # --- Per-head attention output, stored transposed into the concat scratch
    #     at a tile-aligned dynamic SUBLANE offset (cheap; no lane shuffles).
    o_h = jnp.dot(p, v, preferred_element_type=jnp.float32)             # (n, d)
    row = pl.multiple_of(hi * d_pad, d_pad)
    catT_ref[pl.ds(row, d), :] = o_h.T                                   # (d, n)

    # --- Last head: ONE K=dim output-projection GEMM (+ bias), and a single
    #     whole-block store per batch element (no per-head partial stores).
    @pl.when(hi == heads - 1)
    def _():
        cat = catT_ref[...].T                                            # (n, heads*d_pad)
        out = jnp.dot(cat, wo_ref[...],
                      preferred_element_type=jnp.float32) + bo_ref[...]  # (n, dim)
        o_ref[0] = out.astype(o_ref.dtype)


def attention_pallas(x, w_qkv, w_out, b_out, heads):
    """x: (b, n, dim); w_qkv: (3*dim, dim); w_out: (dim, dim); b_out: (dim,)."""
    b, n, dim = x.shape
    assert dim % heads == 0
    d = dim // heads
    d_pad = _round_up(d, 8)                 # f32 sublane tile -> aligned concat offsets
    scale = float(dim) ** (-0.5)            # module scales by dim**-0.5 (full dim)

    # ---- one-time wrapper-side weight pre-arrangement (layout plumbing only) ----
    w_t = w_qkv.T                                                 # (dim, 3*dim); y = x @ w_t

    def split_heads(w2d):                                         # (dim, dim) -> (heads, dim, d)
        return w2d.reshape(dim, heads, d).transpose(1, 0, 2)

    # Fold the softmax scale into the Q projection (one-time weight transform).
    wqkv_heads = jnp.concatenate(
        [split_heads(w_t[:, :dim] * scale),
         split_heads(w_t[:, dim:2 * dim]),
         split_heads(w_t[:, 2 * dim:])], axis=-1)                 # (heads, dim, 3*d)

    # Padded Wo^T: rows grouped per head, head_dim padded d -> d_pad with zeros
    # so the concat scratch's pad rows contribute nothing.
    wo_t = w_out.T.reshape(heads, d, dim)
    if d_pad != d:
        wo_t = jnp.pad(wo_t, ((0, 0), (0, d_pad - d), (0, 0)))
    wo_t = wo_t.reshape(heads * d_pad, dim)                       # (heads*d_pad, dim)
    bo2 = b_out.reshape(1, dim)

    # TODO(synk): bf16-cast x / weights here on v6e/v7x (keep f32 accumulation).

    kernel = functools.partial(attention_kernel, n=n, heads=heads, d=d, d_pad=d_pad)

    out = pl.pallas_call(
        kernel,
        out_shape=jax.ShapeDtypeStruct((b, n, dim), x.dtype),
        grid=(b, heads),
        in_specs=[
            pl.BlockSpec((1, n, dim), lambda bi, hi: (bi, 0, 0)),        # x (per batch elem)
            pl.BlockSpec((1, dim, 3 * d), lambda bi, hi: (hi, 0, 0)),    # per-head QKV weight
            _const_block_spec((heads * d_pad, dim), lambda bi, hi: (0, 0)),  # Wo^T (padded)
            _const_block_spec((1, dim), lambda bi, hi: (0, 0)),          # bias
        ],
        # TODO(synk): for dim < 128, a lane-dense output slab (wrapper-side
        # reshape so the last dim is a multiple of 128) would avoid masked vst.
        out_specs=pl.BlockSpec((1, n, dim), lambda bi, hi: (bi, 0, 0)),
        scratch_shapes=[pltpu.VMEM((heads * d_pad, n), jnp.float32)],
        compiler_params=pltpu.CompilerParams(
            dimension_semantics=("parallel", "arbitrary")),
    )(x, wqkv_heads, wo_t, bo2)
    return out


def attention_ref(x, w_qkv, w_out, b_out, heads):
    b, n, dim = x.shape
    d = dim // heads
    scale = float(dim) ** (-0.5)
    qkv = x @ w_qkv.T                                             # (b, n, 3*dim)
    q, k, v = jnp.split(qkv, 3, axis=-1)

    def to_heads(t):
        return t.reshape(b, n, heads, d).transpose(0, 2, 1, 3)    # (b, h, n, d)

    q, k, v = map(to_heads, (q, k, v))
    dots = jnp.einsum('bhid,bhjd->bhij', q, k) * scale
    attn = jax.nn.softmax(dots, axis=-1)
    out = jnp.einsum('bhij,bhjd->bhid', attn, v)
    out = out.transpose(0, 2, 1, 3).reshape(b, n, dim)
    return out @ w_out.T + b_out


if __name__ == "__main__":
    batch, seq, dim, heads = 2, 8, 32, 8

    key = jax.random.PRNGKey(0)
    kx, k1, k2, k3 = jax.random.split(key, 4)

    x = jax.random.normal(kx, (batch, seq, dim), dtype=jnp.float32)
    # Deterministic parameter init (roughly PyTorch Linear scale 1/sqrt(fan_in)).
    bound = 1.0 / dim ** 0.5
    w_qkv = jax.random.uniform(k1, (3 * dim, dim), jnp.float32, -bound, bound)
    w_out = jax.random.uniform(k2, (dim, dim), jnp.float32, -bound, bound)
    b_out = jax.random.uniform(k3, (dim,), jnp.float32, -bound, bound)

    out = attention_pallas(x, w_qkv, w_out, b_out, heads)
    out = jax.block_until_ready(out)

    ref = attention_ref(x, w_qkv, w_out, b_out, heads)
    assert out.shape == (batch, seq, dim)
    assert jnp.allclose(out, ref, atol=1e-4, rtol=1e-4), "mismatch vs. JAX reference"

    print("KERNEL_OK")
</pallas_src>

<mosaic_0001>
module attributes {stable_mosaic.version = 11 : i64} {
  func.func @attention_kernel(%arg0: i32, %arg1: i32, %arg2: memref<1x8x32xf32, #tpu.memory_space<vmem>>, %arg3: memref<1x32x12xf32, #tpu.memory_space<vmem>>, %arg4: memref<64x32xf32, #tpu.memory_space<vmem>>, %arg5: memref<1x32xf32, #tpu.memory_space<vmem>>, %arg6: memref<1x8x32xf32, #tpu.memory_space<vmem>>, %arg7: memref<64x8xf32, #tpu.memory_space<vmem>>) attributes {dimension_semantics = [#tpu.dimension_semantics<parallel>, #tpu.dimension_semantics<arbitrary>], iteration_bounds = array<i64: 2, 8>, scalar_prefetch = 0 : i64, scratch_operands = 1 : i64, tpu.core_type = #tpu.core_type<tc>, window_params = [{transform_indices = @transform_0, window_bounds = array<i64: 1, 8, 32>}, {transform_indices = @transform_1, window_bounds = array<i64: 1, 32, 12>}, {pipeline_mode = #tpu.pipeline_mode<synchronous>, transform_indices = @transform_2, window_bounds = array<i64: 64, 32>}, {pipeline_mode = #tpu.pipeline_mode<synchronous>, transform_indices = @transform_3, window_bounds = array<i64: 1, 32>}, {transform_indices = @transform_4, window_bounds = array<i64: 1, 8, 32>}]} {
    %c0 = arith.constant 0 : index
    %c0_0 = arith.constant 0 : index
    %c0_1 = arith.constant 0 : index
    %0 = vector.load %arg2[%c0, %c0_0, %c0_1] : memref<1x8x32xf32, #tpu.memory_space<vmem>>, vector<1x8x32xf32>
    %1 = vector.shape_cast %0 : vector<1x8x32xf32> to vector<8x32xf32>
    %c0_i32 = arith.constant 0 : i32
    %2 = arith.cmpi eq, %arg1, %c0_i32 : i32
    %3 = arith.extui %2 : i1 to i32
    %c0_i32_2 = arith.constant 0 : i32
    %4 = arith.cmpi ne, %3, %c0_i32_2 : i32
    scf.if %4 {
      %cst_12 = arith.constant 0.000000e+00 : f32
      %31 = vector.broadcast %cst_12 : f32 to vector<64x8xf32>
      %c0_13 = arith.constant 0 : index
      %c0_14 = arith.constant 0 : index
      %32 = vector.load %arg7[%c0_13, %c0_14] : memref<64x8xf32, #tpu.memory_space<vmem>>, vector<64x8xf32>
      tpu.vector_store %arg7[%c0_13, %c0_14], %31 {strides = array<i32>} : memref<64x8xf32, #tpu.memory_space<vmem>>, vector<64x8xf32>,
    } else {
    }
    %c0_3 = arith.constant 0 : index
    %c0_4 = arith.constant 0 : index
    %c0_5 = arith.constant 0 : index
    %5 = vector.load %arg3[%c0_3, %c0_4, %c0_5] : memref<1x32x12xf32, #tpu.memory_space<vmem>>, vector<1x32x12xf32>
    %6 = vector.shape_cast %5 : vector<1x32x12xf32> to vector<32x12xf32>
    %cst = arith.constant dense<0.000000e+00> : vector<8x12xf32>
    %7 = tpu.matmul %1, %6, %cst {dimension_numbers = #tpu.dot_dimension_numbers<[1], [0], [0], [1], [0, 0, 1, 1], [], []>} : vector<8x32xf32>, vector<32x12xf32>, vector<8x12xf32> -> vector<8x12xf32>
    %8 = vector.extract_strided_slice %7 {offsets = [0, 0], sizes = [8, 4], strides = [1, 1]} : vector<8x12xf32> to vector<8x4xf32>
    %9 = vector.extract_strided_slice %7 {offsets = [0, 4], sizes = [8, 4], strides = [1, 1]} : vector<8x12xf32> to vector<8x4xf32>
    %10 = vector.extract_strided_slice %7 {offsets = [0, 8], sizes = [8, 4], strides = [1, 1]} : vector<8x12xf32> to vector<8x4xf32>
    %cst_6 = arith.constant dense<0.000000e+00> : vector<8x8xf32>
    %11 = tpu.matmul %8, %9, %cst_6 {dimension_numbers = #tpu.dot_dimension_numbers<[1], [1], [0], [0], [0, 0, 1, 0], [], []>} : vector<8x4xf32>, vector<8x4xf32>, vector<8x8xf32> -> vector<8x8xf32>
    %cst_7 = arith.constant dense<0xFF800000> : vector<8xf32>
    %12 = vector.multi_reduction <maximumf>, %11, %cst_7 [1] : vector<8x8xf32> to vector<8xf32>
    %13 = vector.shape_cast %12 : vector<8xf32> to vector<8x1xf32>
    %14 = vector.broadcast %13 : vector<8x1xf32> to vector<8x8xf32>
    %15 = arith.subf %11, %14 : vector<8x8xf32>
    %16 = math.exp %15 : vector<8x8xf32>
    %cst_8 = arith.constant dense<0.000000e+00> : vector<8xf32>
    %17 = vector.multi_reduction <add>, %16, %cst_8 [1] : vector<8x8xf32> to vector<8xf32>
    %18 = vector.shape_cast %17 : vector<8xf32> to vector<8x1xf32>
    %19 = tpu.reciprocal %18 : vector<8x1xf32> -> vector<8x1xf32>
    %20 = vector.broadcast %19 : vector<8x1xf32> to vector<8x8xf32>
    %21 = arith.mulf %16, %20 : vector<8x8xf32>
    %cst_9 = arith.constant dense<0.000000e+00> : vector<8x4xf32>
    %22 = tpu.matmul %21, %10, %cst_9 {dimension_numbers = #tpu.dot_dimension_numbers<[1], [0], [0], [1], [0, 0, 1, 1], [], []>} : vector<8x8xf32>, vector<8x4xf32>, vector<8x4xf32> -> vector<8x4xf32>
    %c8_i32 = arith.constant 8 : i32
    %23 = arith.muli %arg1, %c8_i32 : i32
    %24 = tpu.assume_multiple %23, 8 : i32
    %25 = tpu.transpose %22, [1, 0] : vector<8x4xf32> -> vector<4x8xf32>
    %26 = arith.index_cast %24 : i32 to index
    %c0_10 = arith.constant 0 : index
    %27 = vector.load %arg7[%26, %c0_10] : memref<64x8xf32, #tpu.memory_space<vmem>>, vector<4x8xf32>
    tpu.vector_store %arg7[%26, %c0_10], %25 {strides = array<i32>} : memref<64x8xf32, #tpu.memory_space<vmem>>, vector<4x8xf32>,
    %c7_i32 = arith.constant 7 : i32
    %28 = arith.cmpi eq, %arg1, %c7_i32 : i32
    %29 = arith.extui %28 : i1 to i32
    %c0_i32_11 = arith.constant 0 : i32
    %30 = arith.cmpi ne, %29, %c0_i32_11 : i32
    scf.if %30 {
      %c0_12 = arith.constant 0 : index
      %c0_13 = arith.constant 0 : index
      %31 = vector.load %arg7[%c0_12, %c0_13] : memref<64x8xf32, #tpu.memory_space<vmem>>, vector<64x8xf32>
      %32 = tpu.transpose %31, [1, 0] : vector<64x8xf32> -> vector<8x64xf32>
      %c0_14 = arith.constant 0 : index
      %c0_15 = arith.constant 0 : index
      %33 = vector.load %arg4[%c0_14, %c0_15] : memref<64x32xf32, #tpu.memory_space<vmem>>, vector<64x32xf32>
      %cst_16 = arith.constant dense<0.000000e+00> : vector<8x32xf32>
      %34 = tpu.matmul %32, %33, %cst_16 {dimension_numbers = #tpu.dot_dimension_numbers<[1], [0], [0], [1], [0, 0, 1, 1], [], []>} : vector<8x64xf32>, vector<64x32xf32>, vector<8x32xf32> -> vector<8x32xf32>
      %c0_17 = arith.constant 0 : index
      %c0_18 = arith.constant 0 : index
      %35 = vector.load %arg5[%c0_17, %c0_18] : memref<1x32xf32, #tpu.memory_space<vmem>>, vector<1x32xf32>
      %36 = vector.broadcast %35 : vector<1x32xf32> to vector<8x32xf32>
      %37 = arith.addf %34, %36 : vector<8x32xf32>
      %c0_19 = arith.constant 0 : index
      %c0_20 = arith.constant 0 : index
      %c0_21 = arith.constant 0 : index
      %38 = vector.load %arg6[%c0_19, %c0_20, %c0_21] : memref<1x8x32xf32, #tpu.memory_space<vmem>>, vector<1x8x32xf32>
      %39 = vector.shape_cast %38 : vector<1x8x32xf32> to vector<8x32xf32>
      %40 = vector.shape_cast %37 : vector<8x32xf32> to vector<1x8x32xf32>
      tpu.vector_store %arg6[%c0_19, %c0_20, %c0_21], %40 {strides = array<i32>} : memref<1x8x32xf32, #tpu.memory_space<vmem>>, vector<1x8x32xf32>,
    } else {
    }
    return
  }
  func.func @transform_0(%arg0: i32, %arg1: i32) -> (i32, i32, i32) {
    %c0_i32 = arith.constant 0 : i32
    %c0_i32_0 = arith.constant 0 : i32
    %c0_i32_1 = arith.constant 0 : i32
    return %arg0, %c0_i32, %c0_i32_0 : i32, i32, i32
  }
  func.func @transform_1(%arg0: i32, %arg1: i32) -> (i32, i32, i32) {
    %c0_i32 = arith.constant 0 : i32
    %c0_i32_0 = arith.constant 0 : i32
    %c0_i32_1 = arith.constant 0 : i32
    return %arg1, %c0_i32, %c0_i32_0 : i32, i32, i32
  }
  func.func @transform_2(%arg0: i32, %arg1: i32) -> (i32, i32) {
    %c0_i32 = arith.constant 0 : i32
    %c0_i32_0 = arith.constant 0 : i32
    %c0_i32_1 = arith.constant 0 : i32
    return %c0_i32, %c0_i32_0 : i32, i32
  }
  func.func @transform_3(%arg0: i32, %arg1: i32) -> (i32, i32) {
    %c0_i32 = arith.constant 0 : i32
    %c0_i32_0 = arith.constant 0 : i32
    %c0_i32_1 = arith.constant 0 : i32
    return %c0_i32, %c0_i32_0 : i32, i32
  }
  func.func @transform_4(%arg0: i32, %arg1: i32) -> (i32, i32, i32) {
    %c0_i32 = arith.constant 0 : i32
    %c0_i32_0 = arith.constant 0 : i32
    %c0_i32_1 = arith.constant 0 : i32
    return %arg0, %c0_i32, %c0_i32_0 : i32, i32, i32
  }
}

</mosaic_0001>

<llo_original>
// kernel: tpu_custom_call.1
$region0: #{tpu_custom_call.1}
  #allocation0 [shape = 'u32[]', space=smem, size = 0x4, offset = 0x4, fixed_abs, tag = 'smem constant byte address 0x4 - core index']
  #allocation1 [shape = 'u32[72,128]{1,0:T(1,128)}', space=vmem, size = 0x9000, scoped, tag = 'internal scratch']
  #allocation2 [shape = 'f32[64,8]{1,0:T(8,128)}', space=vmem, size = 0x8000, scoped, tag = 'scratch operand']
  %s0 = inlined_call_operand.vmem [shape: f32[2,8,32], index: 0, kind: input, shape index: {}]
  %s1 = inlined_call_operand.vmem [shape: f32[8,32,12], index: 1, kind: input, shape index: {}]
  %s2 = inlined_call_operand.vmem [shape: f32[64,32], index: 2, kind: input, shape index: {}]
  %s3 = inlined_call_operand.vmem [shape: f32[1,32], index: 3, kind: input, shape index: {}]
  %s4 = inlined_call_operand.hbm [shape: f32[2,8,32], index: 4, kind: output, shape index: {}]
  %s5 = sld [smem:[#allocation0]]
  $region57: #{tpu_custom_call.1} parent=0
    _
  %s7 = ssub.s32 1, %s5
  %s8 = scalar_select 0, %s7, %s5
  $region1: #{tpu_custom_call.1} parent=0
    #allocation3 [shape = 'u8[8192]{0}', space=vmem, size = 0x2000, scoped, tag = 'output window, operand 0']
    #allocation4 [shape = 's32[2]{0}', space=sflag, size = 0x8, scoped, tag = 'scoped memory for tpu_custom_call.1']
    %9 = vsyncpa [#allocation4], 0
    %s10 = scalar_lea.sflag [#allocation4], 1
    %11 = vsyncpa %s10, 0
    loop: start=0, step=1, limit=18
    $region2: #{tpu_custom_call.1} parent=1 // loop_pre_header
      _
    $region3: #{tpu_custom_call.1} parent=1 // loop_header
      %s13 = sphi 0, %s17
      %p14 = scmp.ge.s32.totalorder %s13, 18
      %s20 = sphi 0, %s32
      %s21 = sphi 0, %s28
      %s22 = sphi 0, %s20
      %s23 = sphi 0, %s21
      %s24 = sphi 0, %s22
      %s25 = sphi 0, %s23
      %s35 = sphi 0, %s37
      %s38 = sphi 0, %s35
      %s39 = sphi 0, %s38
      %s55 = sphi 0, %s39
      %s61 = sphi 0, %s63
      %s64 = sphi 0, %s61
      %s65 = sphi 0, %s64
      %s81 = sphi 0, %s65
      %s85 = sphi 0, %s85
      %s87 = sphi 0, %s85
      %s88 = sphi 0, %s87
      %s102 = sphi 0, %s88
      %s106 = sphi 0, %s106
      %s108 = sphi 0, %s106
      %s109 = sphi 0, %s108
      %s123 = sphi 0, %s109
      %s129 = sphi 0, %s131
      %s132 = sphi 0, %s129
      %s133 = sphi 0, %s132
      %s149 = sphi 0, %s133
    $region4: #{tpu_custom_call.1} parent=1 // loop_header_branch
      %16 = sbr.rel (%p14) target = $region8
    $region5: #{tpu_custom_call.1} parent=1 // loop_body
      %s18 = ssub.s32 %s13, 1
      %s19 = ssub.s32 %s13, 2
      %s26 = sadd.s32 1, %s21
      %p27 = scmp.ge.s32.totalorder %s26, 8
      %s28 = scalar_select %p27, 0, %s26
      %s29 = sadd.s32 1, %s20
      %s30 = scalar_select %p27, %s29, %s20
      %p31 = scmp.ge.s32.totalorder %s30, 2
      %s32 = scalar_select %p31, 0, %s30
      %s33 = ssub.s32 %s20, %s32
      %p34 = scmp.eq.s32.totalorder %s33, 0
      %s36 = sadd.s32 %s35, 1
      %s37 = scalar_select %p34, %s35, %s36
      %p40 = pneg %p34
      %p41 = scmp.eq.s32.totalorder %s13, 15
      %p42 = por %p40, %p41
      %p43 = scmp.ne.s32.totalorder %s35, %s38
      %p44 = scmp.eq.s32.totalorder %s13, 0
      %p45 = por %p43, %p44
      %p46 = scmp.ne.s32.totalorder %s35, %s38
      %p47 = scmp.eq.s32.totalorder %s18, 15
      %p48 = por %p46, %p47
      %p49 = scmp.ne.s32.totalorder %s38, %s39
      %p50 = scmp.eq.s32.totalorder %s18, 0
      %p51 = por %p49, %p50
      %p52 = scmp.ne.s32.totalorder %s38, %s39
      %p53 = scmp.eq.s32.totalorder %s19, 15
      %p54 = por %p52, %p53
      %p56 = scmp.ne.s32.totalorder %s39, %s55
      %p57 = scmp.eq.s32.totalorder %s19, 0
      %p58 = por %p56, %p57
      %s59 = ssub.s32 %s21, %s28
      %p60 = scmp.eq.s32.totalorder %s59, 0
      %s62 = sadd.s32 %s61, 1
      %s63 = scalar_select %p60, %s61, %s62
      %p66 = pneg %p60
      %p67 = scmp.eq.s32.totalorder %s13, 15
      %p68 = por %p66, %p67
      %p69 = scmp.ne.s32.totalorder %s61, %s64
      %p70 = scmp.eq.s32.totalorder %s13, 0
      %p71 = por %p69, %p70
      %p72 = scmp.ne.s32.totalorder %s61, %s64
      %p73 = scmp.eq.s32.totalorder %s18, 15
      %p74 = por %p72, %p73
      %p75 = scmp.ne.s32.totalorder %s64, %s65
      %p76 = scmp.eq.s32.totalorder %s18, 0
      %p77 = por %p75, %p76
      %p78 = scmp.ne.s32.totalorder %s64, %s65
      %p79 = scmp.eq.s32.totalorder %s19, 15
      %p80 = por %p78, %p79
      %p82 = scmp.ne.s32.totalorder %s65, %s81
      %p83 = scmp.eq.s32.totalorder %s19, 0
      %p84 = por %p82, %p83
      %s86 = sadd.s32 %s85, 1
      %p89 = scmp.eq.s32.totalorder %s13, 15
      %p90 = scmp.ne.s32.totalorder %s85, %s87
      %p91 = scmp.eq.s32.totalorder %s13, 0
      %p92 = por %p90, %p91
      %p93 = scmp.ne.s32.totalorder %s85, %s87
      %p94 = scmp.eq.s32.totalorder %s18, 15
      %p95 = por %p93, %p94
      %p96 = scmp.ne.s32.totalorder %s87, %s88
      %p97 = scmp.eq.s32.totalorder %s18, 0
      %p98 = por %p96, %p97
      %p99 = scmp.ne.s32.totalorder %s87, %s88
      %p100 = scmp.eq.s32.totalorder %s19, 15
      %p101 = por %p99, %p100
      %p103 = scmp.ne.s32.totalorder %s88, %s102
      %p104 = scmp.eq.s32.totalorder %s19, 0
      %p105 = por %p103, %p104
      %s107 = sadd.s32 %s106, 1
      %p110 = scmp.eq.s32.totalorder %s13, 15
      %p111 = scmp.ne.s32.totalorder %s106, %s108
      %p112 = scmp.eq.s32.totalorder %s13, 0
      %p113 = por %p111, %p112
      %p114 = scmp.ne.s32.totalorder %s106, %s108
      %p115 = scmp.eq.s32.totalorder %s18, 15
      %p116 = por %p114, %p115
      %p117 = scmp.ne.s32.totalorder %s108, %s109
      %p118 = scmp.eq.s32.totalorder %s18, 0
      %p119 = por %p117, %p118
      %p120 = scmp.ne.s32.totalorder %s108, %s109
      %p121 = scmp.eq.s32.totalorder %s19, 15
      %p122 = por %p120, %p121
      %p124 = scmp.ne.s32.totalorder %s109, %s123
      %p125 = scmp.eq.s32.totalorder %s19, 0
      %p126 = por %p124, %p125
      %s127 = ssub.s32 %s20, %s32
      %p128 = scmp.eq.s32.totalorder %s127, 0
      %s130 = sadd.s32 %s129, 1
      %s131 = scalar_select %p128, %s129, %s130
      %p134 = pneg %p128
      %p135 = scmp.eq.s32.totalorder %s13, 15
      %p136 = por %p134, %p135
      %p137 = scmp.ne.s32.totalorder %s129, %s132
      %p138 = scmp.eq.s32.totalorder %s13, 0
      %p139 = por %p137, %p138
      %p140 = scmp.ne.s32.totalorder %s129, %s132
      %p141 = scmp.eq.s32.totalorder %s18, 15
      %p142 = por %p140, %p141
      %p143 = scmp.ne.s32.totalorder %s132, %s133
      %p144 = scmp.eq.s32.totalorder %s18, 0
      %p145 = por %p143, %p144
      %p146 = scmp.ne.s32.totalorder %s132, %s133
      %p147 = scmp.eq.s32.totalorder %s19, 15
      %p148 = por %p146, %p147
      %p150 = scmp.ne.s32.totalorder %s133, %s149
      %p151 = scmp.eq.s32.totalorder %s19, 0
      %p152 = por %p150, %p151
      %p153 = scmp.le.s32.totalorder 1, %s13
      %p154 = scmp.lt.s32.totalorder %s13, 17
      %p155 = pnand %p153, %p154
      %p156 = pneg %p155
      // Predicated region
      $region9: #{tpu_custom_call.1} parent=5 // pred_check
        _
      $region10: #{tpu_custom_call.1} parent=5 // pred_check_branch
        %158 = sbr.rel (%p155) target = $region12
      $region11: #{tpu_custom_call.1} parent=5 // pred_region
        %s159 = ssub.s32 %s13, 1
        // Predicated region
        $region13: #{tpu_custom_call.1} parent=11 // pred_check
          %p160 = pneg %p98
        $region14: #{tpu_custom_call.1} parent=11 // pred_check_branch
          %162 = sbr.rel (%p160) target = $region16
        $region15: #{tpu_custom_call.1} parent=11 // pred_region
          _
        $region16: #{tpu_custom_call.1} parent=11 // pred_fallthru
          _
        // Predicated region
        $region17: #{tpu_custom_call.1} parent=11 // pred_check
          %p163 = pneg %p119
        $region18: #{tpu_custom_call.1} parent=11 // pred_check_branch
          %165 = sbr.rel (%p163) target = $region20
        $region19: #{tpu_custom_call.1} parent=11 // pred_region
          _
        $region20: #{tpu_custom_call.1} parent=11 // pred_fallthru
          _
      $region12: #{tpu_custom_call.1} parent=5 // pred_fallthru
        _
      %p166 = scmp.lt.s32.totalorder %s13, 16
      // Predicated region
      $region21: #{tpu_custom_call.1} parent=5 // pred_check
        %p167 = pneg %p166
      $region22: #{tpu_custom_call.1} parent=5 // pred_check_branch
        %169 = sbr.rel (%p167) target = $region24
      $region23: #{tpu_custom_call.1} parent=5 // pred_region
        // Predicated region
        $region25: #{tpu_custom_call.1} parent=23 // pred_check
          %p170 = pneg %p45
        $region26: #{tpu_custom_call.1} parent=23 // pred_check_branch
          %172 = sbr.rel (%p170) target = $region28
        $region27: #{tpu_custom_call.1} parent=23 // pred_region
          %p173 = scmp.lt.s32.totalorder %s20, 1
          %s174 = scalar_select %p173, %s20, 1
          %s175 = smul.addr %s174, 8
          %s176 = scalar_lea.vmem %s0, %s175
        $region28: #{tpu_custom_call.1} parent=23 // pred_fallthru
          _
        // Predicated region
        $region29: #{tpu_custom_call.1} parent=23 // pred_check
          %p177 = pneg %p71
        $region30: #{tpu_custom_call.1} parent=23 // pred_check_branch
          %179 = sbr.rel (%p177) target = $region32
        $region31: #{tpu_custom_call.1} parent=23 // pred_region
          %p180 = scmp.lt.s32.totalorder %s21, 7
          %s181 = scalar_select %p180, %s21, 7
          %s182 = smul.addr %s181, 4
          %s183 = smul.addr %s182, 8
          %s184 = scalar_lea.vmem %s1, %s183
        $region32: #{tpu_custom_call.1} parent=23 // pred_fallthru
          _
      $region24: #{tpu_custom_call.1} parent=5 // pred_fallthru
        _
      %p185 = scmp.le.s32.totalorder 1, %s13
      %p186 = scmp.lt.s32.totalorder %s13, 17
      %p187 = pnand %p185, %p186
      %p188 = pneg %p187
      // Predicated region
      $region33: #{tpu_custom_call.1} parent=5 // pred_check
        _
      $region34: #{tpu_custom_call.1} parent=5 // pred_check_branch
        %190 = sbr.rel (%p187) target = $region36
      $region35: #{tpu_custom_call.1} parent=5 // pred_region
        %s191 = ssub.s32 %s13, 1
        %p192 = scmp.lt.s32.totalorder %s22, 1
        %s193 = scalar_select %p192, %s22, 1
        %s194 = smul.addr %s193, 8
        %s195 = scalar_lea.vmem %s0, %s194
        %p196 = pneg %p51
        %p197 = pneg %p48
        %p198 = scmp.lt.s32.totalorder %s23, 7
        %s199 = scalar_select %p198, %s23, 7
        %s200 = smul.addr %s199, 4
        %s201 = smul.addr %s200, 8
        %s202 = scalar_lea.vmem %s1, %s201
        %p203 = pneg %p77
        %p204 = pneg %p74
        %p205 = pneg %p98
        %p206 = pneg %p95
        %p207 = pneg %p119
        %p208 = pneg %p116
        %p209 = pneg %p145
        %p210 = pneg %p142
        %s211 = sand.u32 %s132, 1
        %s212 = scalar_lea.sflag [#allocation4], %s211
        %s213 = sand.u32 %s132, 1
        %s214 = smul.addr %s213, 8
        %s215 = scalar_lea.vmem [#allocation3], %s214
        %p216 = scmp.lt.s32.totalorder %s22, 1
        %s217 = scalar_select %p216, %s22, 1
        %s218 = smul.addr %s217, 8
        %s219 = scalar_lea.vmem %s0, %s218
        %p220 = scmp.lt.s32.totalorder %s23, 7
        %s221 = scalar_select %p220, %s23, 7
        %s222 = smul.addr %s221, 4
        %s223 = smul.addr %s222, 8
        %s224 = scalar_lea.vmem %s1, %s223
        %v225 = vld [vmem:[%s219] sm:$0xff]
        %p226 = scmp.eq.s32.totalorder %s23, 0
        // Predicated region
        $region37: #{tpu_custom_call.1} parent=35 // pred_check
          %p227 = pneg %p226
        $region38: #{tpu_custom_call.1} parent=35 // pred_check_branch
          %229 = sbr.rel (%p227) target = $region40
        $region39: #{tpu_custom_call.1} parent=35 // pred_region
          %vm230 = vcmask 64512
          %231 = vst.msk [vmem:[#allocation2] sm:$0xff] %vm230, 0.0
          %232 = vst.msk [vmem:[#allocation2 + $0x8] sm:$0xff] %vm230, 0.0
          %233 = vst.msk [vmem:[#allocation2 + $0x10] sm:$0xff] %vm230, 0.0
          %234 = vst.msk [vmem:[#allocation2 + $0x18] sm:$0xff] %vm230, 0.0
          %235 = vst.msk [vmem:[#allocation2 + $0x20] sm:$0xff] %vm230, 0.0
          %236 = vst.msk [vmem:[#allocation2 + $0x28] sm:$0xff] %vm230, 0.0
          %237 = vst.msk [vmem:[#allocation2 + $0x30] sm:$0xff] %vm230, 0.0
          %238 = vst.msk [vmem:[#allocation2 + $0x38] sm:$0xff] %vm230, 0.0
        $region40: #{tpu_custom_call.1} parent=35 // pred_fallthru
          _
        %v239 = vld [vmem:[%s224] sm:$0xff]
        %v240 = vld [vmem:[%s224 + $0x8] sm:$0xff]
        %v241 = vld [vmem:[%s224 + $0x10] sm:$0xff]
        %v242 = vld [vmem:[%s224 + $0x18] sm:$0xff]
        %vm243 = vcmask 261120
        %v245 = vsel %vm243, %v225, 0
        %247 = vmatpush.msra.mxu0 0.0
        %248 = vmatpush.msra.mxu0 0.0
        %249 = vmatpush.msra.mxu0 0.0
        %250 = vmatpush.msra.mxu0 0.0
        %251 = vmatpush.msra.mxu0 0.0
        %252 = vmatpush.msra.mxu0 0.0
        %253 = vmatpush.msra.mxu0 0.0
        %254 = vmatpush.msra.mxu0 0.0
        %255 = vmatpush.msra.mxu0 0.0
        %256 = vmatpush.msra.mxu0 0.0
        %257 = vmatpush.msra.mxu0 0.0
        %258 = vmatpush.msra.mxu0 0.0
        %259 = vmatpush.msra.mxu0 %v242
        %260 = vmatpush.msra.mxu0 %v241
        %261 = vmatpush.msra.mxu0 %v240
        %262 = vmatpush.msra.mxu0 %v239
        %263 = vmatmul.f32.gmra.mxu0 %v245
        %v264 = vpop.f32.mrf.mxu0
        %v265 = vadd.f32 0.0, %v264
        %266 = vdwg.mxu0
        %268 = vrot.lane.b32.xlu0 %v265, 124
        %v269 = vpop.permute.xlu0 %268
        %vm270 = vcmask 31744
        %v271 = vsel %vm270, %v265, 0
        %v273 = vsel %vm270, %v269, 0
        %275 = vmatpush.xpose.msra.mxu0 0.0
        %276 = vmatpush.xpose.msra.mxu0 0.0
        %277 = vmatpush.xpose.msra.mxu0 0.0
        %278 = vmatpush.xpose.msra.mxu0 0.0
        %279 = vmatpush.xpose.msra.mxu0 0.0
        %280 = vmatpush.xpose.msra.mxu0 0.0
        %281 = vmatpush.xpose.msra.mxu0 0.0
        %282 = vmatpush.xpose.msra.mxu0 0.0
        %283 = vmatpush.xpose.msra.mxu0 0.0
        %284 = vmatpush.xpose.msra.mxu0 0.0
        %285 = vmatpush.xpose.msra.mxu0 0.0
        %286 = vmatpush.xpose.msra.mxu0 0.0
        %287 = vmatpush.xpose.msra.mxu0 0.0
        %288 = vmatpush.xpose.msra.mxu0 0.0
        %289 = vmatpush.xpose.msra.mxu0 0.0
        %290 = vmatpush.xpose.msra.mxu0 %v273
        %291 = vmatmul.f32.gmra.mxu0 %v271
        %v292 = vpop.f32.mrf.mxu0
        %v293 = vadd.f32 0.0, %v292
        %294 = vdwg.mxu0
        %vm295 = vcmask 64512
        %v296 = vsel %vm295, %v293, -inf
        %297 = vmax.xlane.f32.xlu0 %v296
        %v298 = vpop.xlane.xlu0 %297
        %v299 = vsub.f32 %v293, %v298
        %v300 = vmul.f32 %v299, 1.442695
        %v301 = vpow.pop %v300
        %v302 = vsel %vm295, %v301, 0.0
        %303 = vadd.xlane.f32.xlu0 %v302
        %v304 = vpop.xlane.xlu0 %303
        %v305 = vrcp.pop %v304
        %v306 = vmul.f32 %v304, %v305
        %v307 = vsub.f32 1.0, %v306
        %v308 = vmul.f32 %v305, %v307
        %v309 = vadd.f32 %v305, %v308
        %vm310 = vweird.f32 %v304
        %vm311 = vweird.f32 %v305
        %vm312 = vmor %vm310, %vm311
        %v313 = vsel %vm312, %v305, %v309
        %v314 = vand.u32 2147483647, %v304
        %vm315 = vcmp.eq.f32.partialorder %v314, 8.507059e+37
        %v316 = vand.u32 %v304, 2147483648
        %v317 = vor.u32 1.1754944e-38, %v316
        %v318 = vsel %vm315, %v317, %v313
        %v319 = vmul.f32 %v301, %v318
        %320 = vrot.lane.b32.xlu0 %v265, 120
        %v321 = vpop.permute.xlu0 %320
        %v324 = vsel %vm295, %v319, 0
        %326 = vmatpush.msra.mxu0 0.0
        %327 = vmatpush.msra.mxu0 0.0
        %328 = vmatpush.msra.mxu0 0.0
        %329 = vmatpush.msra.mxu0 0.0
        %330 = vmatpush.msra.mxu0 0.0
        %331 = vmatpush.msra.mxu0 0.0
        %332 = vmatpush.msra.mxu0 0.0
        %333 = vmatpush.msra.mxu0 0.0
        %334 = vmatpush.msra.mxu0 0.0
        %335 = vmatpush.msra.mxu0 0.0
        %336 = vmatpush.msra.mxu0 0.0
        %337 = vmatpush.msra.mxu0 0.0
        %338 = vmatpush.msra.mxu0 0.0
        %339 = vmatpush.msra.mxu0 0.0
        %340 = vmatpush.msra.mxu0 0.0
        %341 = vmatpush.msra.mxu0 %v321
        %342 = vmatmul.f32.gmra.mxu0 %v324
        %v343 = vpop.f32.mrf.mxu0
        %v344 = vadd.f32 0.0, %v343
        %345 = vdwg.mxu0
        %s346 = smul.u32 %s23, 8
        %347 = vxpose.xlu0.b32.start [1/16] %v344, 128
        %348 = vxpose.xlu0.b32.cont [2/16] 0.0, 128
        %349 = vxpose.xlu0.b32.cont [3/16] 0.0, 128
        %350 = vxpose.xlu0.b32.cont [4/16] 0.0, 128
        %351 = vxpose.xlu0.b32.cont [5/16] 0.0, 128
        %352 = vxpose.xlu0.b32.cont [6/16] 0.0, 128
        %353 = vxpose.xlu0.b32.cont [7/16] 0.0, 128
        %354 = vxpose.xlu0.b32.cont [8/16] 0.0, 128
        %355 = vxpose.xlu0.b32.cont [9/16] 0.0, 128
        %356 = vxpose.xlu0.b32.cont [10/16] 0.0, 128
        %357 = vxpose.xlu0.b32.cont [11/16] 0.0, 128
        %358 = vxpose.xlu0.b32.cont [12/16] 0.0, 128
        %359 = vxpose.xlu0.b32.cont [13/16] 0.0, 128
        %360 = vxpose.xlu0.b32.cont [14/16] 0.0, 128
        %361 = vxpose.xlu0.b32.cont [15/16] 0.0, 128
        %362 = vxpose.xlu0.b32.end [16/16] 0.0, 128
        %v363 = vpop.trf.xlu0
        %v364 = vpop.trf.xlu0
        %v365 = vpop.trf.xlu0
        %v366 = vpop.trf.xlu0
        %v367 = vpop.trf.xlu0
        %v368 = vpop.trf.xlu0
        %v369 = vpop.trf.xlu0
        %v370 = vpop.trf.xlu0
        %v371 = vpop.trf.xlu0
        %v372 = vpop.trf.xlu0
        %v373 = vpop.trf.xlu0
        %v374 = vpop.trf.xlu0
        %v375 = vpop.trf.xlu0
        %v376 = vpop.trf.xlu0
        %v377 = vpop.trf.xlu0
        %v378 = vpop.trf.xlu0
        %s379 = scalar_lea.vmem [#allocation2], %s346
        %vm380 = vcmask 60416
        %381 = vst.msk [vmem:[%s379] sm:$0xf] %vm380, %v363
        %p382 = scmp.eq.s32.totalorder %s23, 7
        // Predicated region
        $region41: #{tpu_custom_call.1} parent=35 // pred_check
          %p383 = pneg %p382
        $region42: #{tpu_custom_call.1} parent=35 // pred_check_branch
          %385 = sbr.rel (%p383) target = $region44
        $region43: #{tpu_custom_call.1} parent=35 // pred_region
          %v386 = vld [vmem:[#allocation2] sm:$0xff]
          %v387 = vld [vmem:[#allocation2 + $0x8] sm:$0xff]
          %v388 = vld [vmem:[#allocation2 + $0x10] sm:$0xff]
          %v389 = vld [vmem:[#allocation2 + $0x18] sm:$0xff]
          %v390 = vld [vmem:[#allocation2 + $0x20] sm:$0xff]
          %v391 = vld [vmem:[#allocation2 + $0x28] sm:$0xff]
          %v392 = vld [vmem:[#allocation2 + $0x30] sm:$0xff]
          %v393 = vld [vmem:[#allocation2 + $0x38] sm:$0xff]
          %394 = vxpose.xlu0.b32.start [1/16] %v386, 128
          %395 = vxpose.xlu0.b32.cont [2/16] %v387, 128
          %396 = vxpose.xlu0.b32.cont [3/16] %v388, 128
          %397 = vxpose.xlu0.b32.cont [4/16] %v389, 128
          %398 = vxpose.xlu0.b32.cont [5/16] %v390, 128
          %399 = vxpose.xlu0.b32.cont [6/16] %v391, 128
          %400 = vxpose.xlu0.b32.cont [7/16] %v392, 128
          %401 = vxpose.xlu0.b32.cont [8/16] %v393, 128
          %402 = vxpose.xlu0.b32.cont [9/16] 0.0, 128
          %403 = vxpose.xlu0.b32.cont [10/16] 0.0, 128
          %404 = vxpose.xlu0.b32.cont [11/16] 0.0, 128
          %405 = vxpose.xlu0.b32.cont [12/16] 0.0, 128
          %406 = vxpose.xlu0.b32.cont [13/16] 0.0, 128
          %407 = vxpose.xlu0.b32.cont [14/16] 0.0, 128
          %408 = vxpose.xlu0.b32.cont [15/16] 0.0, 128
          %409 = vxpose.xlu0.b32.end [16/16] 0.0, 128
          %v410 = vpop.trf.xlu0
          %v411 = vpop.trf.xlu0
          %v412 = vpop.trf.xlu0
          %v413 = vpop.trf.xlu0
          %v414 = vpop.trf.xlu0
          %v415 = vpop.trf.xlu0
          %v416 = vpop.trf.xlu0
          %v417 = vpop.trf.xlu0
          %v418 = vpop.trf.xlu0
          %v419 = vpop.trf.xlu0
          %v420 = vpop.trf.xlu0
          %v421 = vpop.trf.xlu0
          %v422 = vpop.trf.xlu0
          %v423 = vpop.trf.xlu0
          %v424 = vpop.trf.xlu0
          %v425 = vpop.trf.xlu0
          %v426 = vld [vmem:[%s2] sm:$0xff]
          %v427 = vld [vmem:[%s2 + $0x8] sm:$0xff]
          %v428 = vld [vmem:[%s2 + $0x10] sm:$0xff]
          %v429 = vld [vmem:[%s2 + $0x18] sm:$0xff]
          %v430 = vld [vmem:[%s2 + $0x20] sm:$0xff]
          %v431 = vld [vmem:[%s2 + $0x28] sm:$0xff]
          %v432 = vld [vmem:[%s2 + $0x30] sm:$0xff]
          %v433 = vld [vmem:[%s2 + $0x38] sm:$0xff]
          %v434 = vld [vmem:[%s3] sm:$0x1]
          %v436 = vperm.slane %v434, 0
          %vm438 = vcmask 523264
          %v440 = vsel %vm438, %v410, 0
          %442 = vmatpush.msra.mxu0 0.0
          %443 = vmatpush.msra.mxu0 0.0
          %444 = vmatpush.msra.mxu0 0.0
          %445 = vmatpush.msra.mxu0 0.0
          %446 = vmatpush.msra.mxu0 0.0
          %447 = vmatpush.msra.mxu0 0.0
          %448 = vmatpush.msra.mxu0 0.0
          %449 = vmatpush.msra.mxu0 0.0
          %450 = vmatpush.msra.mxu0 %v433
          %451 = vmatpush.msra.mxu0 %v432
          %452 = vmatpush.msra.mxu0 %v431
          %453 = vmatpush.msra.mxu0 %v430
          %454 = vmatpush.msra.mxu0 %v429
          %455 = vmatpush.msra.mxu0 %v428
          %456 = vmatpush.msra.mxu0 %v427
          %457 = vmatpush.msra.mxu0 %v426
          %458 = vmatmul.f32.gmra.mxu0 %v440
          %v459 = vpop.f32.mrf.mxu0
          %v460 = vadd.f32 %v436, %v459
          %461 = vdwg.mxu0
          %462 = vst.msk [vmem:[%s215] sm:$0xff] %vm243, %v460
        $region44: #{tpu_custom_call.1} parent=35 // pred_fallthru
          _
        %s463 = sand.u32 %s132, 1
        %s464 = scalar_lea.sflag [#allocation4], %s463
        %s465 = sand.u32 %s132, 1
        %s466 = smul.addr %s465, 8
        %s467 = scalar_lea.vmem [#allocation3], %s466
        // Predicated region
        $region45: #{tpu_custom_call.1} parent=35 // pred_check
          %p468 = pneg %p142
        $region46: #{tpu_custom_call.1} parent=35 // pred_check_branch
          %470 = sbr.rel (%p468) target = $region48
        $region47: #{tpu_custom_call.1} parent=35 // pred_region
          %472 = vsyncadd %s464, 0
          %s473 = smul.addr %s22, 8
          %s474 = scalar_lea.hbm %s4, %s473
          %s476 = sshll.u32 %s467, 4
          %s477 = int_to_ptr.vmem [resolvable:$true] %s476
          %s478 = sshll.u32 %s474, 4
          %s479 = int_to_ptr.hbm [resolvable:$true] %s478
          %481 = dma.vmem_to_hbm [thread:$0]  %s477, 128, %s479, %s464
        $region48: #{tpu_custom_call.1} parent=35 // pred_fallthru
          _
      $region36: #{tpu_custom_call.1} parent=5 // pred_fallthru
        _
      %p482 = scmp.le.s32.totalorder 2, %s13
      // Predicated region
      $region49: #{tpu_custom_call.1} parent=5 // pred_check
        %p483 = pneg %p482
      $region50: #{tpu_custom_call.1} parent=5 // pred_check_branch
        %485 = sbr.rel (%p483) target = $region52
      $region51: #{tpu_custom_call.1} parent=5 // pred_region
        %s486 = ssub.s32 %s13, 2
        // Predicated region
        $region53: #{tpu_custom_call.1} parent=51 // pred_check
          %p487 = pneg %p148
        $region54: #{tpu_custom_call.1} parent=51 // pred_check_branch
          %489 = sbr.rel (%p487) target = $region56
        $region55: #{tpu_custom_call.1} parent=51 // pred_region
          %s490 = sand.u32 %s133, 1
          %s491 = scalar_lea.sflag [#allocation4], %s490
          %s492 = sand.u32 %s133, 1
          %s493 = smul.addr %s492, 8
          %s494 = scalar_lea.vmem [#allocation3], %s493
          %496 = dma.done %s491, 128
        $region56: #{tpu_custom_call.1} parent=51 // pred_fallthru
          _
      $region52: #{tpu_custom_call.1} parent=5 // pred_fallthru
        _
    $region6: #{tpu_custom_call.1} parent=1 // loop_footer
      %s17 = sadd.s32 1, %s13
    $region7: #{tpu_custom_call.1} parent=1 // loop_footer_branch
      %12 = sbr.rel target = $region3
    $region8: #{tpu_custom_call.1} parent=1 // loop_exit
      _
    %497 = vsyncpa [#allocation4], 1
    %s498 = scalar_lea.sflag [#allocation4], 1
    %499 = vsyncpa %s498, 1

</llo_original>
